<compile_context>
chip_gen: v7x
topology: tpu7x:2x2x1
jax: 0.10.0
libtpu: 0.0.40
codegen_flags: <defaults>
</compile_context>

<pallas_src>
import functools

import jax
import jax.numpy as jnp
from jax import lax
from jax.experimental import pallas as pl
from jax.experimental.pallas import tpu as pltpu


_SUBLANE = 8
_LANE = 128
# Keep total VMEM demand under ~40 MiB so the same tiling is safe on v7x
# (64 MiB physical VMEM) as well as v5e/v6e (128 MiB).
_VMEM_TARGET = 40 * 1024 * 1024
_VMEM_CAP = 48 * 1024 * 1024


def _round_up(x, m):
    return ((x + m - 1) // m) * m


def _cdiv(a, b):
    return (a + b - 1) // b


# ---------------------------------------------------------------------------
# Kernel 1: W-resident path.  W/bias are constant-index VMEM blocks (fetched
# once, kept resident), the grid streams rows of x.  No K axis, no scratch.
# ---------------------------------------------------------------------------
def _resident_kernel(x_ref, w_ref, b_ref, o_ref):
    # x_ref: (tm, H) native dtype   w_ref: (H, O) compute dtype (pre-transposed)
    # b_ref: (1, O)  f32            o_ref: (tm, O) out dtype
    acc = jnp.dot(x_ref[...].astype(w_ref.dtype), w_ref[...],
                  preferred_element_type=jnp.float32)
    o_ref[...] = (acc + b_ref[...]).astype(o_ref.dtype)


# ---------------------------------------------------------------------------
# Kernel 2: tiled (B, O, H) fallback for weights too large for VMEM.
# f32 outputs accumulate directly into the resident output block (bias folded
# into the k==0 init); other dtypes use an f32 VMEM scratch accumulator.
# ---------------------------------------------------------------------------
def _tiled_kernel(x_ref, w_ref, b_ref, o_ref, *scratch, h_valid, tk, mask_k):
    acc_ref = scratch[0] if scratch else o_ref
    k = pl.program_id(2)

    @pl.when(k == 0)
    def _init():
        if scratch:
            acc_ref[...] = jnp.zeros_like(acc_ref)
        else:
            # f32 output: fold the bias into the accumulator init.
            acc_ref[...] = jnp.broadcast_to(b_ref[...], acc_ref.shape)

    x_blk = x_ref[...]
    if mask_k:
        # H is not a multiple of tk: zero the out-of-range K columns of the
        # last block (the matching W rows are zero-padded in the wrapper), so
        # padded partial products are exactly zero.
        col = lax.broadcasted_iota(jnp.int32, x_blk.shape, 1) + k * tk
        x_blk = jnp.where(col < h_valid, x_blk, 0)

    acc_ref[...] += jnp.dot(x_blk.astype(w_ref.dtype), w_ref[...],
                            preferred_element_type=jnp.float32)

    if scratch:
        @pl.when(k == pl.num_programs(2) - 1)
        def _finalize():
            o_ref[...] = (acc_ref[...] + b_ref[...]).astype(o_ref.dtype)


# ---------------------------------------------------------------------------
# Wrappers
# ---------------------------------------------------------------------------
def _forward_resident(x, w_ho, b_row, out_dtype, *, tm, w_total, row_cost):
    B, H = x.shape
    O = w_ho.shape[1]

    # Largest tm whose double-buffered x/out tiles + resident W fit the budget.
    tm_budget = (_VMEM_TARGET - 2 * w_total) // (2 * row_cost)
    tm = min(tm, tm_budget)
    if B <= tm:
        tm = B                                   # full-extent block: always legal
    else:
        tm = max(_SUBLANE, (tm // 16) * 16)      # bf16-friendly sublane multiple
    # v7x has 2 TensorCores sharded over 'parallel' axes: ensure the single
    # parallel axis has >= 2 blocks for medium/large batches.
    if _cdiv(B, tm) == 1 and B >= 64:
        tm = _round_up(_cdiv(B, 2), 16)
    nb = _cdiv(B, tm)

    need = 2 * w_total + 2 * tm * row_cost
    vmem_limit = int(min(max(need + (2 << 20), 16 << 20), _VMEM_CAP))

    x_bytes = jnp.dtype(x.dtype).itemsize
    w_bytes = jnp.dtype(w_ho.dtype).itemsize
    o_bytes = jnp.dtype(out_dtype).itemsize
    cost = pl.CostEstimate(
        flops=2 * B * H * O,
        transcendentals=0,
        bytes_accessed=B * H * x_bytes + H * O * w_bytes + B * O * o_bytes + O * 4,
    )

    return pl.pallas_call(
        _resident_kernel,
        out_shape=jax.ShapeDtypeStruct((B, O), out_dtype),
        grid_spec=pltpu.PrefetchScalarGridSpec(
            num_scalar_prefetch=0,
            grid=(nb,),
            in_specs=[
                pl.BlockSpec((tm, H), lambda i: (i, 0)),   # x rows (streamed)
                pl.BlockSpec((H, O), lambda i: (0, 0)),    # W: fetched once, resident
                pl.BlockSpec((1, O), lambda i: (0, 0)),    # bias: resident
            ],
            out_specs=pl.BlockSpec((tm, O), lambda i: (i, 0)),
        ),
        compiler_params=pltpu.CompilerParams(
            dimension_semantics=("parallel",),
            vmem_limit_bytes=vmem_limit,
        ),
        cost_estimate=cost,
    )(x, w_ho, b_row)


def _forward_tiled(x, w_ho, b_row, out_dtype, *, tm, tn, tk):
    B, H = x.shape
    O = w_ho.shape[1]

    # Clamp tiles: either the full (always-legal) extent or an aligned tile.
    tm = B if B <= tm else max(_SUBLANE, (tm // 16) * 16)
    tn = O if O <= tn else max(_LANE, (tn // _LANE) * _LANE)
    tk = H if H <= tk else max(_LANE, (tk // _LANE) * _LANE)

    mask_k = (H % tk) != 0
    if mask_k:
        # Pad only the (small) weight along K; the matching x columns are
        # masked to zero in-kernel, so padded partials are exactly zero.
        Hp = _round_up(H, tk)
        w_ho = jnp.zeros((Hp, O), w_ho.dtype).at[:H, :].set(w_ho)
    nk = _cdiv(w_ho.shape[0], tk)

    use_scratch = jnp.dtype(out_dtype) != jnp.dtype(jnp.float32)
    kernel = functools.partial(_tiled_kernel, h_valid=H, tk=tk, mask_k=mask_k)
    scratch_shapes = ((pltpu.VMEM((tm, tn), jnp.float32),) if use_scratch else ())

    x_bytes = jnp.dtype(x.dtype).itemsize
    w_bytes = jnp.dtype(w_ho.dtype).itemsize
    o_bytes = jnp.dtype(out_dtype).itemsize
    need = (2 * (tm * tk * x_bytes + tk * tn * w_bytes + tm * tn * o_bytes + tn * 4)
            + tm * tk * w_bytes + tm * tn * 4
            + (tm * tn * 4 if use_scratch else 0))
    vmem_limit = int(min(max(need + (2 << 20), 16 << 20), _VMEM_CAP))

    cost = pl.CostEstimate(
        flops=2 * B * H * O,
        transcendentals=0,
        bytes_accessed=(B * H * x_bytes
                        + _cdiv(B, tm) * w_ho.shape[0] * O * w_bytes
                        + B * O * o_bytes + O * 4),
    )

    return pl.pallas_call(
        kernel,
        out_shape=jax.ShapeDtypeStruct((B, O), out_dtype),
        grid_spec=pltpu.PrefetchScalarGridSpec(
            num_scalar_prefetch=0,
            grid=(_cdiv(B, tm), _cdiv(O, tn), nk),
            in_specs=[
                pl.BlockSpec((tm, tk), lambda i, j, k: (i, k)),   # x tile
                pl.BlockSpec((tk, tn), lambda i, j, k: (k, j)),   # W^T tile
                pl.BlockSpec((1, tn), lambda i, j, k: (0, j)),    # bias tile
            ],
            out_specs=pl.BlockSpec((tm, tn), lambda i, j, k: (i, j)),
            scratch_shapes=scratch_shapes,
        ),
        compiler_params=pltpu.CompilerParams(
            dimension_semantics=("parallel", "parallel", "arbitrary"),
            vmem_limit_bytes=vmem_limit,
        ),
        cost_estimate=cost,
    )(x, w_ho, b_row)


def logreg_forward(x, weight, bias, *,
                   compute_dtype=jnp.bfloat16,
                   transposed_weight=False,
                   tm=512, tn=512, tk=1024,
                   force_path=None):
    """nn.Linear(hid_dim, out_dim) forward: y = x @ weight.T + bias.

    weight: (out_dim, hid_dim) as in torch; pass transposed_weight=True if the
    parameter is already stored as (hid_dim, out_dim) to avoid the one-time
    transpose.  force_path in {None, "resident", "tiled"} (None = auto).
    """
    B, H = x.shape
    if transposed_weight:
        H2, O = weight.shape
    else:
        O, H2 = weight.shape
    assert H == H2, "weight / hidden-dim mismatch"
    out_dtype = x.dtype

    # Tiny-shape bypass: at a few MXU tiles of work the pallas_call is pure
    # fixed overhead; XLA's fused dot is strictly faster.
    if force_path is None and B * H * O < 128 * 128 * 128:
        w_ho = weight if transposed_weight else weight.T
        return (jnp.dot(x, w_ho.astype(x.dtype),
                        preferred_element_type=jnp.float32)
                + bias).astype(out_dtype)

    # One-time tiny layout prep on W/bias only.  x is passed through untouched
    # in its native dtype (no wrapper pad/cast pass over x) and cast to bf16
    # inside the kernel.
    # TODO(synk): store the weight pre-transposed as [H, O] in the params and
    # pass transposed_weight=True so even this small W transpose disappears.
    w_ho = (weight if transposed_weight else weight.T).astype(compute_dtype)
    b_row = bias.reshape(1, O).astype(jnp.float32)

    x_bytes = jnp.dtype(x.dtype).itemsize
    w_bytes = jnp.dtype(compute_dtype).itemsize
    o_bytes = jnp.dtype(out_dtype).itemsize
    w_total = H * O * w_bytes + O * 4                          # resident W + bias
    row_cost = H * (x_bytes + w_bytes) + O * (o_bytes + 4)     # per streamed row

    resident_ok = 2 * w_total + 32 * row_cost <= _VMEM_TARGET
    if force_path == "tiled":
        resident_ok = False
    elif force_path == "resident":
        assert resident_ok, "weight too large to keep resident in VMEM"

    if resident_ok:
        return _forward_resident(x, w_ho, b_row, out_dtype,
                                 tm=tm, w_total=w_total, row_cost=row_cost)
    return _forward_tiled(x, w_ho, b_row, out_dtype, tm=tm, tn=tn, tk=tk)


if __name__ == "__main__":
    key = jax.random.PRNGKey(0)

    def make_problem(k, batch, hid_dim, out_dim):
        kx, kw, kb = jax.random.split(k, 3)
        bound = 1.0 / (hid_dim ** 0.5)
        weight = jax.random.uniform(kw, (out_dim, hid_dim), jnp.float32, -bound, bound)
        bias = jax.random.uniform(kb, (out_dim,), jnp.float32, -bound, bound)
        x = jax.random.normal(kx, (batch, hid_dim), jnp.float32)
        return x, weight, bias

    def ref_bf16(x, weight, bias):
        # Same math as the kernels: bf16 operands, f32 MXU accumulation.
        return (jnp.dot(x.astype(jnp.bfloat16), weight.T.astype(jnp.bfloat16),
                        preferred_element_type=jnp.float32) + bias).astype(x.dtype)

    k1, k2, k3 = jax.random.split(key, 3)

    # 1) W-resident Pallas path (the common case), aligned small shapes.
    x, w, b = make_problem(k1, batch=64, hid_dim=256, out_dim=128)
    out = jax.jit(functools.partial(logreg_forward, force_path="resident"))(x, w, b)
    jax.block_until_ready(out)
    assert out.shape == (64, 128)
    assert jnp.allclose(out, ref_bf16(x, w, b), atol=2e-2, rtol=2e-2)

    # 2) W-resident path with ragged, non-tile-aligned shapes.
    x, w, b = make_problem(k2, batch=50, hid_dim=200, out_dim=35)
    out = jax.jit(functools.partial(logreg_forward, force_path="resident"))(x, w, b)
    jax.block_until_ready(out)
    assert out.shape == (50, 35)
    assert jnp.allclose(out, ref_bf16(x, w, b), atol=2e-2, rtol=2e-2)

    # 3) Tiled K-reduction fallback (forced at small shapes/tiles to test it),
    #    including ragged K (masked) and ragged O (boundary blocks).
    x, w, b = make_problem(k3, batch=64, hid_dim=300, out_dim=144)
    out = jax.jit(functools.partial(
        logreg_forward, force_path="tiled", tm=32, tn=128, tk=128))(x, w, b)
    jax.block_until_ready(out)
    assert out.shape == (64, 144)
    assert jnp.allclose(out, ref_bf16(x, w, b), atol=2e-2, rtol=2e-2)

    # 4) Tiny-shape bypass (the original demo's LogReg(32, 16) size).
    x, w, b = make_problem(key, batch=8, hid_dim=32, out_dim=16)
    out = jax.jit(logreg_forward)(x, w, b)
    jax.block_until_ready(out)
    ref = jnp.dot(x, w.T, preferred_element_type=jnp.float32) + b
    assert out.shape == (8, 16)
    assert jnp.allclose(out, ref, atol=1e-4, rtol=1e-4)

    print("KERNEL_OK")
</pallas_src>

<mosaic_0001>
module attributes {stable_mosaic.version = 11 : i64} {
  func.func @_resident_kernel(%arg0: i32, %arg1: memref<32x256xf32, #tpu.memory_space<vmem>>, %arg2: memref<256x128xbf16, #tpu.memory_space<vmem>>, %arg3: memref<1x128xf32, #tpu.memory_space<vmem>>, %arg4: memref<32x128xf32, #tpu.memory_space<vmem>>) attributes {dimension_semantics = [#tpu.dimension_semantics<parallel>], iteration_bounds = array<i64: 2>, scalar_prefetch = 0 : i64, scratch_operands = 0 : i64, tpu.core_type = #tpu.core_type<tc>, window_params = [{transform_indices = @transform_0, window_bounds = array<i64: 32, 256>}, {pipeline_mode = #tpu.pipeline_mode<synchronous>, transform_indices = @transform_1, window_bounds = array<i64: 256, 128>}, {pipeline_mode = #tpu.pipeline_mode<synchronous>, transform_indices = @transform_2, window_bounds = array<i64: 1, 128>}, {transform_indices = @transform_3, window_bounds = array<i64: 32, 128>}]} {
    %c0 = arith.constant 0 : index
    %c0_0 = arith.constant 0 : index
    %0 = vector.load %arg1[%c0, %c0_0] : memref<32x256xf32, #tpu.memory_space<vmem>>, vector<32x256xf32>
    %1 = arith.truncf %0 : vector<32x256xf32> to vector<32x256xbf16>
    %c0_1 = arith.constant 0 : index
    %c0_2 = arith.constant 0 : index
    %2 = vector.load %arg2[%c0_1, %c0_2] : memref<256x128xbf16, #tpu.memory_space<vmem>>, vector<256x128xbf16>
    %cst = arith.constant dense<0.000000e+00> : vector<32x128xf32>
    %3 = tpu.matmul %1, %2, %cst {dimension_numbers = #tpu.dot_dimension_numbers<[1], [0], [0], [1], [0, 0, 1, 1], [], []>} : vector<32x256xbf16>, vector<256x128xbf16>, vector<32x128xf32> -> vector<32x128xf32>
    %c0_3 = arith.constant 0 : index
    %c0_4 = arith.constant 0 : index
    %4 = vector.load %arg3[%c0_3, %c0_4] : memref<1x128xf32, #tpu.memory_space<vmem>>, vector<1x128xf32>
    %5 = vector.broadcast %4 : vector<1x128xf32> to vector<32x128xf32>
    %6 = arith.addf %3, %5 : vector<32x128xf32>
    %c0_5 = arith.constant 0 : index
    %c0_6 = arith.constant 0 : index
    %7 = vector.load %arg4[%c0_5, %c0_6] : memref<32x128xf32, #tpu.memory_space<vmem>>, vector<32x128xf32>
    tpu.vector_store %arg4[%c0_5, %c0_6], %6 {strides = array<i32>} : memref<32x128xf32, #tpu.memory_space<vmem>>, vector<32x128xf32>,
    return
  }
  func.func @transform_0(%arg0: i32) -> (i32, i32) {
    %c0_i32 = arith.constant 0 : i32
    %c0_i32_0 = arith.constant 0 : i32
    return %arg0, %c0_i32 : i32, i32
  }
  func.func @transform_1(%arg0: i32) -> (i32, i32) {
    %c0_i32 = arith.constant 0 : i32
    %c0_i32_0 = arith.constant 0 : i32
    %c0_i32_1 = arith.constant 0 : i32
    return %c0_i32, %c0_i32_0 : i32, i32
  }
  func.func @transform_2(%arg0: i32) -> (i32, i32) {
    %c0_i32 = arith.constant 0 : i32
    %c0_i32_0 = arith.constant 0 : i32
    %c0_i32_1 = arith.constant 0 : i32
    return %c0_i32, %c0_i32_0 : i32, i32
  }
  func.func @transform_3(%arg0: i32) -> (i32, i32) {
    %c0_i32 = arith.constant 0 : i32
    %c0_i32_0 = arith.constant 0 : i32
    return %arg0, %c0_i32 : i32, i32
  }
}

</mosaic_0001>

<llo_original>
// kernel: logreg_forward.1
$region0: #{logreg_forward.1}
  #allocation0 [shape = 'u32[]', space=smem, size = 0x4, offset = 0x4, fixed_abs, tag = 'smem constant byte address 0x4 - core index']
  #allocation1 [shape = 'u32[144,128]{1,0:T(1,128)}', space=vmem, size = 0x12000, scoped, tag = 'internal scratch']
  %s0 = inlined_call_operand.vmem [shape: f32[64,256], index: 0, kind: input, shape index: {}]
  %s1 = inlined_call_operand.vmem [shape: bf16[256,128], index: 1, kind: input, shape index: {}]
  %s2 = inlined_call_operand.vmem [shape: f32[1,128], index: 2, kind: input, shape index: {}]
  %s3 = inlined_call_operand.hbm [shape: f32[64,128], index: 3, kind: output, shape index: {}]
  %s4 = sld [smem:[#allocation0]]
  $region45: #{logreg_forward.1} parent=0
    _
  %s6 = ssub.s32 1, %s4
  %s7 = scalar_select 0, %s6, %s4
  $region1: #{logreg_forward.1} parent=0
    #allocation2 [shape = 'u8[32768]{0}', space=vmem, size = 0x8000, scoped, tag = 'output window, operand 0']
    #allocation3 [shape = 's32[2]{0}', space=sflag, size = 0x8, scoped, tag = 'scoped memory for logreg_forward.1']
    %8 = vsyncpa [#allocation3], 0
    %s9 = scalar_lea.sflag [#allocation3], 1
    %10 = vsyncpa %s9, 0
    loop: start=0, step=1, limit=4
    $region2: #{logreg_forward.1} parent=1 // loop_pre_header
      _
    $region3: #{logreg_forward.1} parent=1 // loop_header
      %s12 = sphi 0, %s16
      %p13 = scmp.ge.s32.totalorder %s12, 4
      %s22 = sphi 0, %s24
      %s25 = sphi 0, %s22
      %s26 = sphi 0, %s25
      %s42 = sphi 0, %s26
      %s46 = sphi 0, %s46
      %s48 = sphi 0, %s46
      %s49 = sphi 0, %s48
      %s63 = sphi 0, %s49
      %s67 = sphi 0, %s67
      %s69 = sphi 0, %s67
      %s70 = sphi 0, %s69
      %s84 = sphi 0, %s70
      %s90 = sphi 0, %s92
      %s93 = sphi 0, %s90
      %s94 = sphi 0, %s93
      %s110 = sphi 0, %s94
    $region4: #{logreg_forward.1} parent=1 // loop_header_branch
      %15 = sbr.rel (%p13) target = $region8
    $region5: #{logreg_forward.1} parent=1 // loop_body
      %s17 = ssub.s32 %s12, 1
      %s18 = ssub.s32 %s12, 2
      %s19 = sadd.s32 %s12, 1
      %s20 = ssub.s32 %s12, %s19
      %p21 = scmp.eq.s32.totalorder %s20, 0
      %s23 = sadd.s32 %s22, 1
      %s24 = scalar_select %p21, %s22, %s23
      %p27 = pneg %p21
      %p28 = scmp.eq.s32.totalorder %s12, 1
      %p29 = por %p27, %p28
      %p30 = scmp.ne.s32.totalorder %s22, %s25
      %p31 = scmp.eq.s32.totalorder %s12, 0
      %p32 = por %p30, %p31
      %p33 = scmp.ne.s32.totalorder %s22, %s25
      %p34 = scmp.eq.s32.totalorder %s17, 1
      %p35 = por %p33, %p34
      %p36 = scmp.ne.s32.totalorder %s25, %s26
      %p37 = scmp.eq.s32.totalorder %s17, 0
      %p38 = por %p36, %p37
      %p39 = scmp.ne.s32.totalorder %s25, %s26
      %p40 = scmp.eq.s32.totalorder %s18, 1
      %p41 = por %p39, %p40
      %p43 = scmp.ne.s32.totalorder %s26, %s42
      %p44 = scmp.eq.s32.totalorder %s18, 0
      %p45 = por %p43, %p44
      %s47 = sadd.s32 %s46, 1
      %p50 = scmp.eq.s32.totalorder %s12, 1
      %p51 = scmp.ne.s32.totalorder %s46, %s48
      %p52 = scmp.eq.s32.totalorder %s12, 0
      %p53 = por %p51, %p52
      %p54 = scmp.ne.s32.totalorder %s46, %s48
      %p55 = scmp.eq.s32.totalorder %s17, 1
      %p56 = por %p54, %p55
      %p57 = scmp.ne.s32.totalorder %s48, %s49
      %p58 = scmp.eq.s32.totalorder %s17, 0
      %p59 = por %p57, %p58
      %p60 = scmp.ne.s32.totalorder %s48, %s49
      %p61 = scmp.eq.s32.totalorder %s18, 1
      %p62 = por %p60, %p61
      %p64 = scmp.ne.s32.totalorder %s49, %s63
      %p65 = scmp.eq.s32.totalorder %s18, 0
      %p66 = por %p64, %p65
      %s68 = sadd.s32 %s67, 1
      %p71 = scmp.eq.s32.totalorder %s12, 1
      %p72 = scmp.ne.s32.totalorder %s67, %s69
      %p73 = scmp.eq.s32.totalorder %s12, 0
      %p74 = por %p72, %p73
      %p75 = scmp.ne.s32.totalorder %s67, %s69
      %p76 = scmp.eq.s32.totalorder %s17, 1
      %p77 = por %p75, %p76
      %p78 = scmp.ne.s32.totalorder %s69, %s70
      %p79 = scmp.eq.s32.totalorder %s17, 0
      %p80 = por %p78, %p79
      %p81 = scmp.ne.s32.totalorder %s69, %s70
      %p82 = scmp.eq.s32.totalorder %s18, 1
      %p83 = por %p81, %p82
      %p85 = scmp.ne.s32.totalorder %s70, %s84
      %p86 = scmp.eq.s32.totalorder %s18, 0
      %p87 = por %p85, %p86
      %s88 = ssub.s32 %s12, %s19
      %p89 = scmp.eq.s32.totalorder %s88, 0
      %s91 = sadd.s32 %s90, 1
      %s92 = scalar_select %p89, %s90, %s91
      %p95 = pneg %p89
      %p96 = scmp.eq.s32.totalorder %s12, 1
      %p97 = por %p95, %p96
      %p98 = scmp.ne.s32.totalorder %s90, %s93
      %p99 = scmp.eq.s32.totalorder %s12, 0
      %p100 = por %p98, %p99
      %p101 = scmp.ne.s32.totalorder %s90, %s93
      %p102 = scmp.eq.s32.totalorder %s17, 1
      %p103 = por %p101, %p102
      %p104 = scmp.ne.s32.totalorder %s93, %s94
      %p105 = scmp.eq.s32.totalorder %s17, 0
      %p106 = por %p104, %p105
      %p107 = scmp.ne.s32.totalorder %s93, %s94
      %p108 = scmp.eq.s32.totalorder %s18, 1
      %p109 = por %p107, %p108
      %p111 = scmp.ne.s32.totalorder %s94, %s110
      %p112 = scmp.eq.s32.totalorder %s18, 0
      %p113 = por %p111, %p112
      %p114 = scmp.le.s32.totalorder 1, %s12
      %p115 = scmp.lt.s32.totalorder %s12, 3
      %p116 = pnand %p114, %p115
      %p117 = pneg %p116
      // Predicated region
      $region9: #{logreg_forward.1} parent=5 // pred_check
        _
      $region10: #{logreg_forward.1} parent=5 // pred_check_branch
        %119 = sbr.rel (%p116) target = $region12
      $region11: #{logreg_forward.1} parent=5 // pred_region
        %s120 = ssub.s32 %s12, 1
        // Predicated region
        $region13: #{logreg_forward.1} parent=11 // pred_check
          %p121 = pneg %p59
        $region14: #{logreg_forward.1} parent=11 // pred_check_branch
          %123 = sbr.rel (%p121) target = $region16
        $region15: #{logreg_forward.1} parent=11 // pred_region
          _
        $region16: #{logreg_forward.1} parent=11 // pred_fallthru
          _
        // Predicated region
        $region17: #{logreg_forward.1} parent=11 // pred_check
          %p124 = pneg %p80
        $region18: #{logreg_forward.1} parent=11 // pred_check_branch
          %126 = sbr.rel (%p124) target = $region20
        $region19: #{logreg_forward.1} parent=11 // pred_region
          _
        $region20: #{logreg_forward.1} parent=11 // pred_fallthru
          _
      $region12: #{logreg_forward.1} parent=5 // pred_fallthru
        _
      %p127 = scmp.lt.s32.totalorder %s12, 2
      // Predicated region
      $region21: #{logreg_forward.1} parent=5 // pred_check
        %p128 = pneg %p127
      $region22: #{logreg_forward.1} parent=5 // pred_check_branch
        %130 = sbr.rel (%p128) target = $region24
      $region23: #{logreg_forward.1} parent=5 // pred_region
        // Predicated region
        $region25: #{logreg_forward.1} parent=23 // pred_check
          %p131 = pneg %p32
        $region26: #{logreg_forward.1} parent=23 // pred_check_branch
          %133 = sbr.rel (%p131) target = $region28
        $region27: #{logreg_forward.1} parent=23 // pred_region
          %s134 = smul.u32 4, %s12
          %p135 = scmp.lt.s32.totalorder %s134, 7
          %s136 = scalar_select %p135, %s134, 7
          %s137 = smul.addr %s136, 2
          %s138 = smul.addr %s137, 8
          %s139 = scalar_lea.vmem %s0, %s138
          %s140 = smul.u32 4, %s12
        $region28: #{logreg_forward.1} parent=23 // pred_fallthru
          _
      $region24: #{logreg_forward.1} parent=5 // pred_fallthru
        _
      %p141 = scmp.le.s32.totalorder 1, %s12
      %p142 = scmp.lt.s32.totalorder %s12, 3
      %p143 = pnand %p141, %p142
      %p144 = pneg %p143
      // Predicated region
      $region29: #{logreg_forward.1} parent=5 // pred_check
        _
      $region30: #{logreg_forward.1} parent=5 // pred_check_branch
        %146 = sbr.rel (%p143) target = $region32
      $region31: #{logreg_forward.1} parent=5 // pred_region
        %s147 = ssub.s32 %s12, 1
        %s148 = smul.u32 4, %s17
        %p149 = scmp.lt.s32.totalorder %s148, 7
        %s150 = scalar_select %p149, %s148, 7
        %s151 = smul.addr %s150, 2
        %s152 = smul.addr %s151, 8
        %s153 = scalar_lea.vmem %s0, %s152
        %p154 = pneg %p38
        %p155 = pneg %p35
        %p156 = pneg %p59
        %p157 = pneg %p56
        %p158 = pneg %p80
        %p159 = pneg %p77
        %p160 = pneg %p106
        %p161 = pneg %p103
        %s162 = sand.u32 %s93, 1
        %s163 = scalar_lea.sflag [#allocation3], %s162
        %s164 = sand.u32 %s93, 1
        %s165 = smul.addr %s164, 32
        %s166 = scalar_lea.vmem [#allocation2], %s165
        %s167 = smul.u32 4, %s17
        %p168 = scmp.lt.s32.totalorder %s167, 7
        %s169 = scalar_select %p168, %s167, 7
        %s170 = smul.addr %s169, 2
        %s171 = smul.addr %s170, 8
        %s172 = scalar_lea.vmem %s0, %s171
        %s173 = smul.u32 4, %s17
        %s174 = smul.u32 4, %s17
        %v176 = vld [vmem:[%s172] sm:$0xff]
        %v177 = vld [vmem:[%s172 + $0x8] sm:$0xff]
        %v178 = vld [vmem:[%s172 + $0x10] sm:$0xff]
        %v179 = vld [vmem:[%s172 + $0x18] sm:$0xff]
        %v180 = vld [vmem:[%s172 + $0x20] sm:$0xff]
        %v181 = vld [vmem:[%s172 + $0x28] sm:$0xff]
        %v182 = vld [vmem:[%s172 + $0x30] sm:$0xff]
        %v183 = vld [vmem:[%s172 + $0x38] sm:$0xff]
        %v184 = vpack.c.bf16 %v178, %v176
        %v185 = vpack.c.bf16 %v179, %v177
        %v186 = vpack.c.bf16 %v182, %v180
        %v187 = vpack.c.bf16 %v183, %v181
        %v188 = vld [vmem:[%s1] sm:$0xf]
        %v189 = vld [vmem:[%s1 + $0x4] sm:$0xf]
        %v190 = vld [vmem:[%s1 + $0x8] sm:$0xf]
        %v191 = vld [vmem:[%s1 + $0xc] sm:$0xf]
        %v192 = vld [vmem:[%s1 + $0x10] sm:$0xf]
        %v193 = vld [vmem:[%s1 + $0x14] sm:$0xf]
        %v194 = vld [vmem:[%s1 + $0x18] sm:$0xf]
        %v195 = vld [vmem:[%s1 + $0x1c] sm:$0xf]
        %v196 = vld [vmem:[%s1 + $0x20] sm:$0xf]
        %v197 = vld [vmem:[%s1 + $0x24] sm:$0xf]
        %v198 = vld [vmem:[%s1 + $0x28] sm:$0xf]
        %v199 = vld [vmem:[%s1 + $0x2c] sm:$0xf]
        %v200 = vld [vmem:[%s1 + $0x30] sm:$0xf]
        %v201 = vld [vmem:[%s1 + $0x34] sm:$0xf]
        %v202 = vld [vmem:[%s1 + $0x38] sm:$0xf]
        %v203 = vld [vmem:[%s1 + $0x3c] sm:$0xf]
        %v204 = vld [vmem:[%s1 + $0x40] sm:$0xf]
        %v205 = vld [vmem:[%s1 + $0x44] sm:$0xf]
        %v206 = vld [vmem:[%s1 + $0x48] sm:$0xf]
        %v207 = vld [vmem:[%s1 + $0x4c] sm:$0xf]
        %v208 = vld [vmem:[%s1 + $0x50] sm:$0xf]
        %v209 = vld [vmem:[%s1 + $0x54] sm:$0xf]
        %v210 = vld [vmem:[%s1 + $0x58] sm:$0xf]
        %v211 = vld [vmem:[%s1 + $0x5c] sm:$0xf]
        %v212 = vld [vmem:[%s1 + $0x60] sm:$0xf]
        %v213 = vld [vmem:[%s1 + $0x64] sm:$0xf]
        %v214 = vld [vmem:[%s1 + $0x68] sm:$0xf]
        %v215 = vld [vmem:[%s1 + $0x6c] sm:$0xf]
        %v216 = vld [vmem:[%s1 + $0x70] sm:$0xf]
        %v217 = vld [vmem:[%s1 + $0x74] sm:$0xf]
        %v218 = vld [vmem:[%s1 + $0x78] sm:$0xf]
        %v219 = vld [vmem:[%s1 + $0x7c] sm:$0xf]
        %v220 = vld [vmem:[%s2] sm:$0x1]
        %v222 = vlaneseq
        %v223 = vshrl.u32 %v222, 7
        %v224 = vsub.s32 0, %v223
        %v225 = vrot.slane %v220, %v224
        %v259 = vunpack.c.l.b16 %v188
        %v260 = vunpack.c.l.b16 %v189
        %v261 = vunpack.c.l.b16 %v190
        %v262 = vunpack.c.l.b16 %v191
        %v263 = vunpack.c.l.b16 %v192
        %v264 = vunpack.c.l.b16 %v193
        %v265 = vunpack.c.l.b16 %v194
        %v266 = vunpack.c.l.b16 %v195
        %v267 = vunpack.c.l.b16 %v196
        %v268 = vunpack.c.l.b16 %v197
        %v269 = vunpack.c.l.b16 %v198
        %v270 = vunpack.c.l.b16 %v199
        %v271 = vunpack.c.l.b16 %v200
        %v272 = vunpack.c.l.b16 %v201
        %v273 = vunpack.c.l.b16 %v202
        %v274 = vunpack.c.l.b16 %v203
        %v275 = vunpack.c.l.b16 %v204
        %v276 = vunpack.c.l.b16 %v205
        %v277 = vunpack.c.l.b16 %v206
        %v278 = vunpack.c.l.b16 %v207
        %v279 = vunpack.c.l.b16 %v208
        %v280 = vunpack.c.l.b16 %v209
        %v281 = vunpack.c.l.b16 %v210
        %v282 = vunpack.c.l.b16 %v211
        %v283 = vunpack.c.l.b16 %v212
        %v284 = vunpack.c.l.b16 %v213
        %v285 = vunpack.c.l.b16 %v214
        %v286 = vunpack.c.l.b16 %v215
        %v287 = vunpack.c.l.b16 %v216
        %v288 = vunpack.c.l.b16 %v217
        %v289 = vunpack.c.l.b16 %v218
        %v290 = vunpack.c.l.b16 %v219
        %v291 = vpack.c.b16 %v260, %v259
        %v292 = vpack.c.b16 %v262, %v261
        %v293 = vpack.c.b16 %v264, %v263
        %v294 = vpack.c.b16 %v266, %v265
        %v295 = vpack.c.b16 %v268, %v267
        %v296 = vpack.c.b16 %v270, %v269
        %v297 = vpack.c.b16 %v272, %v271
        %v298 = vpack.c.b16 %v274, %v273
        %v299 = vpack.c.b16 %v276, %v275
        %v300 = vpack.c.b16 %v278, %v277
        %v301 = vpack.c.b16 %v280, %v279
        %v302 = vpack.c.b16 %v282, %v281
        %v303 = vpack.c.b16 %v284, %v283
        %v304 = vpack.c.b16 %v286, %v285
        %v305 = vpack.c.b16 %v288, %v287
        %v306 = vpack.c.b16 %v290, %v289
        %323 = vmatprep.subr.bf16.mxu0 0
        %324 = vmatpush1.bf16.msra.mxu0 %v291
        %325 = vmatprep.subr.bf16.mxu0 0
        %326 = vmatpush1.bf16.msra.mxu0 %v292
        %327 = vmatprep.subr.bf16.mxu0 0
        %328 = vmatpush1.bf16.msra.mxu0 %v293
        %329 = vmatprep.subr.bf16.mxu0 0
        %330 = vmatpush1.bf16.msra.mxu0 %v294
        %331 = vmatprep.subr.bf16.mxu0 0
        %332 = vmatpush1.bf16.msra.mxu0 %v295
        %333 = vmatprep.subr.bf16.mxu0 0
        %334 = vmatpush1.bf16.msra.mxu0 %v296
        %335 = vmatprep.subr.bf16.mxu0 0
        %336 = vmatpush1.bf16.msra.mxu0 %v297
        %337 = vmatprep.subr.bf16.mxu0 0
        %338 = vmatpush1.bf16.msra.mxu0 %v298
        %339 = vmatprep.subr.bf16.mxu0 0
        %340 = vmatpush1.bf16.msra.mxu0 %v299
        %341 = vmatprep.subr.bf16.mxu0 0
        %342 = vmatpush1.bf16.msra.mxu0 %v300
        %343 = vmatprep.subr.bf16.mxu0 0
        %344 = vmatpush1.bf16.msra.mxu0 %v301
        %345 = vmatprep.subr.bf16.mxu0 0
        %346 = vmatpush1.bf16.msra.mxu0 %v302
        %347 = vmatprep.subr.bf16.mxu0 0
        %348 = vmatpush1.bf16.msra.mxu0 %v303
        %349 = vmatprep.subr.bf16.mxu0 0
        %350 = vmatpush1.bf16.msra.mxu0 %v304
        %351 = vmatprep.subr.bf16.mxu0 0
        %352 = vmatpush1.bf16.msra.mxu0 %v305
        %353 = vmatprep.subr.bf16.mxu0 0
        %354 = vmatpush1.bf16.msra.mxu0 %v306
        %355 = vmatprep.mubr.bf16.mxu0 %v185
        %356 = vmatmul.mubr.bf16.gmra.mrb[0].mxu0 %v184
        %v357 = vpop.f32.mrb[0].mxu0
        %v358 = vadd.f32 %v225, %v357
        %v359 = vpop.f32.mrb[0].mxu0
        %v360 = vpop.f32.mrb[0].mxu0
        %v361 = vadd.f32 %v225, %v360
        %v362 = vpop.f32.mrb[0].mxu0
        %363 = vmatprep.mubr.bf16.mxu0 %v187
        %364 = vmatmul.mubr.bf16.gmra.mrb[0].mxu0 %v186
        %v365 = vpop.f32.mrb[0].mxu0
        %v366 = vadd.f32 %v225, %v365
        %v367 = vpop.f32.mrb[0].mxu0
        %v368 = vpop.f32.mrb[0].mxu0
        %v369 = vadd.f32 %v225, %v368
        %v370 = vpop.f32.mrb[0].mxu0
        %371 = vdwg.mxu0
        %372 = vst [vmem:[%s166] sm:$0xff] %v358
        %373 = vst [vmem:[%s166 + $0x8] sm:$0xff] %v361
        %374 = vst [vmem:[%s166 + $0x10] sm:$0xff] %v366
        %375 = vst [vmem:[%s166 + $0x18] sm:$0xff] %v369
        %s376 = sand.u32 %s93, 1
        %s377 = scalar_lea.sflag [#allocation3], %s376
        %s378 = sand.u32 %s93, 1
        %s379 = smul.addr %s378, 32
        %s380 = scalar_lea.vmem [#allocation2], %s379
        // Predicated region
        $region33: #{logreg_forward.1} parent=31 // pred_check
          %p381 = pneg %p103
        $region34: #{logreg_forward.1} parent=31 // pred_check_branch
          %383 = sbr.rel (%p381) target = $region36
        $region35: #{logreg_forward.1} parent=31 // pred_region
          %s384 = smul.u32 4, %s17
          %s386 = ssub.s32 512, 512
          %387 = vsyncadd %s377, %s386
          %s388 = smul.addr %s384, 128
          %s389 = scalar_lea.hbm %s3, %s388
          %s390 = sshll.u32 %s380, 4
          %s391 = int_to_ptr.vmem [resolvable:$true] %s390
          %396 = dma.vmem_to_hbm [thread:$0]  %s391, 512, %s389, %s377, 128, 128, 8
        $region36: #{logreg_forward.1} parent=31 // pred_fallthru
          _
      $region32: #{logreg_forward.1} parent=5 // pred_fallthru
        _
      %p397 = scmp.le.s32.totalorder 2, %s12
      // Predicated region
      $region37: #{logreg_forward.1} parent=5 // pred_check
        %p398 = pneg %p397
      $region38: #{logreg_forward.1} parent=5 // pred_check_branch
        %400 = sbr.rel (%p398) target = $region40
      $region39: #{logreg_forward.1} parent=5 // pred_region
        %s401 = ssub.s32 %s12, 2
        // Predicated region
        $region41: #{logreg_forward.1} parent=39 // pred_check
          %p402 = pneg %p109
        $region42: #{logreg_forward.1} parent=39 // pred_check_branch
          %404 = sbr.rel (%p402) target = $region44
        $region43: #{logreg_forward.1} parent=39 // pred_region
          %s405 = sand.u32 %s94, 1
          %s406 = scalar_lea.sflag [#allocation3], %s405
          %s407 = sand.u32 %s94, 1
          %s408 = smul.addr %s407, 32
          %s409 = scalar_lea.vmem [#allocation2], %s408
          %410 = dma.done %s406, 512
        $region44: #{logreg_forward.1} parent=39 // pred_fallthru
          _
      $region40: #{logreg_forward.1} parent=5 // pred_fallthru
        _
    $region6: #{logreg_forward.1} parent=1 // loop_footer
      %s16 = sadd.s32 1, %s12
    $region7: #{logreg_forward.1} parent=1 // loop_footer_branch
      %11 = sbr.rel target = $region3
    $region8: #{logreg_forward.1} parent=1 // loop_exit
      _
    %411 = vsyncpa [#allocation3], 1
    %s412 = scalar_lea.sflag [#allocation3], 1
    %413 = vsyncpa %s412, 1

</llo_original>
